<compile_context>
chip_gen: v7x
topology: tpu7x:2x2x1
jax: 0.10.0
libtpu: 0.0.40
codegen_flags: <defaults>
</compile_context>

<pallas_src>
import functools

import jax
import jax.numpy as jnp
from jax.experimental import pallas as pl
from jax.experimental.pallas import tpu as pltpu

IMAGE_SIZE = 784
LABELS_COUNT = 10
HID1 = 100
HID2 = 50
OUT_PAD = 128          # lane-dense padded output width (>= LABELS_COUNT)
MAX_TILE_B = 1024      # batch tile cap; ~5.5 MiB double-buffered VMEM at bf16


def _round_up(n, m):
    return (n + m - 1) // m * m


def model_c_kernel(x_ref, w0_ref, b0_ref, w1_ref, b1_ref, w2_ref, b2_ref,
                   *rest, p0, p1, use_dropout):
    if use_dropout:
        bits0_ref, bits1_ref, o_ref = rest
    else:
        (o_ref,) = rest
        bits0_ref = bits1_ref = None

    def dropout(h, bits_ref, p):
        if (not use_dropout) or p <= 0.0:
            return h
        # keep iff bits >= round(p * 2^32)  =>  P(keep) = 1 - p
        thr = min(int(round(p * 4294967296.0)), 4294967295)
        keep = bits_ref[...] >= jnp.uint32(thr)
        return jnp.where(keep, h * jnp.float32(1.0 / (1.0 - p)),
                         jnp.float32(0.0))

    # fc0 + relu (+ dropout0): bf16 MXU operands, f32 accumulate
    h = jnp.dot(x_ref[...], w0_ref[...], preferred_element_type=jnp.float32)
    h = jnp.maximum(h + b0_ref[...], 0.0)
    h = dropout(h, bits0_ref, p0)

    # fc1 + relu (+ dropout1)
    h = jnp.dot(h.astype(jnp.bfloat16), w1_ref[...],
                preferred_element_type=jnp.float32)
    h = jnp.maximum(h + b1_ref[...], 0.0)
    h = dropout(h, bits1_ref, p1)

    # fc2 (zero-padded to OUT_PAD lanes) + log_softmax over the real 10 columns
    logits = jnp.dot(h.astype(jnp.bfloat16), w2_ref[...],
                     preferred_element_type=jnp.float32) + b2_ref[...]
    col = jax.lax.broadcasted_iota(jnp.int32, logits.shape, 1)
    z = jnp.where(col < LABELS_COUNT, logits, jnp.float32(-1e30))
    m = jnp.max(z, axis=-1, keepdims=True)
    z = z - m
    lse = jnp.log(jnp.sum(jnp.exp(z), axis=-1, keepdims=True))
    o_ref[...] = (z - lse).astype(o_ref.dtype)


def model_c_forward(x, params, *, p0, p1, seed=0, training=True):
    """x: (B, 1, 28, 28) or (B, 784). Returns (B, 10) log-probabilities."""
    x2d = x.reshape(-1, IMAGE_SIZE).astype(jnp.float32)
    B = x2d.shape[0]
    w0, b0, w1, b1, w2, b2 = params

    tile_b = min(MAX_TILE_B, _round_up(B, 8))
    Bp = _round_up(B, tile_b)
    if Bp != B:
        x2d = jnp.pad(x2d, ((0, Bp - B), (0, 0)))

    # bf16 matmul operands (accumulation stays f32 inside the kernel).
    xb = x2d.astype(jnp.bfloat16)
    w0b = w0.astype(jnp.bfloat16)
    w1b = w1.astype(jnp.bfloat16)
    # Lane-dense (128-wide) output head: zero-pad fc2 weight/bias columns.
    w2p = jnp.zeros((HID2, OUT_PAD), jnp.float32)
    w2p = w2p.at[:, :LABELS_COUNT].set(w2).astype(jnp.bfloat16)
    b2p = jnp.zeros((1, OUT_PAD), jnp.float32).at[:, :LABELS_COUNT].set(b2)

    use_dropout = bool(training) and (p0 > 0.0 or p1 > 0.0)

    operands = [xb, w0b, b0, w1b, b1, w2p, b2p]
    in_specs = [
        pl.BlockSpec((tile_b, IMAGE_SIZE), lambda i: (i, 0)),   # x (streamed)
        pl.BlockSpec((IMAGE_SIZE, HID1), lambda i: (0, 0)),     # w0 (resident)
        pl.BlockSpec((1, HID1), lambda i: (0, 0)),              # b0
        pl.BlockSpec((HID1, HID2), lambda i: (0, 0)),           # w1
        pl.BlockSpec((1, HID2), lambda i: (0, 0)),              # b1
        pl.BlockSpec((HID2, OUT_PAD), lambda i: (0, 0)),        # w2 (padded)
        pl.BlockSpec((1, OUT_PAD), lambda i: (0, 0)),           # b2 (padded)
    ]

    if use_dropout:
        # Host-side random bits (TPU hardware PRNG has no interpret lowering);
        # each batch tile automatically sees distinct bits.
        k0, k1 = jax.random.split(jax.random.PRNGKey(seed))
        bits0 = jax.random.bits(k0, (Bp, HID1), dtype=jnp.uint32)
        bits1 = jax.random.bits(k1, (Bp, HID2), dtype=jnp.uint32)
        operands += [bits0, bits1]
        in_specs += [
            pl.BlockSpec((tile_b, HID1), lambda i: (i, 0)),
            pl.BlockSpec((tile_b, HID2), lambda i: (i, 0)),
        ]

    kernel = functools.partial(model_c_kernel, p0=float(p0), p1=float(p1),
                               use_dropout=use_dropout)

    out = pl.pallas_call(
        kernel,
        grid=(Bp // tile_b,),
        out_shape=jax.ShapeDtypeStruct((Bp, OUT_PAD), jnp.float32),
        in_specs=in_specs,
        out_specs=pl.BlockSpec((tile_b, OUT_PAD), lambda i: (i, 0)),
        compiler_params=pltpu.CompilerParams(
            dimension_semantics=("parallel",),   # shard batch tiles on v7x TCs
            vmem_limit_bytes=32 * 1024 * 1024,
        ),
    )(*operands)

    return out[:B, :LABELS_COUNT]


def reference_forward(x, params):
    """Pure-JAX eval-mode (no dropout) reference for correctness checks."""
    x2d = x.reshape(-1, IMAGE_SIZE).astype(jnp.float32)
    w0, b0, w1, b1, w2, b2 = params
    h = jax.nn.relu(x2d @ w0 + b0)
    h = jax.nn.relu(h @ w1 + b1)
    return jax.nn.log_softmax(h @ w2 + b2, axis=-1)


def init_params(key):
    """Deterministic init matching nn.Linear shapes (stored as (in, out))."""
    k = jax.random.split(key, 6)

    def linear(kw, kb, fan_in, fan_out):
        bound = 1.0 / (fan_in ** 0.5)
        w = jax.random.uniform(kw, (fan_in, fan_out), jnp.float32, -bound, bound)
        b = jax.random.uniform(kb, (1, fan_out), jnp.float32, -bound, bound)
        return w, b

    w0, b0 = linear(k[0], k[1], IMAGE_SIZE, HID1)
    w1, b1 = linear(k[2], k[3], HID1, HID2)
    w2, b2 = linear(k[4], k[5], HID2, LABELS_COUNT)
    return (w0, b0, w1, b1, w2, b2)


if __name__ == "__main__":
    key = jax.random.PRNGKey(0)
    kx, kp = jax.random.split(key)

    B = 8
    x = jax.random.normal(kx, (B, 1, 28, 28), dtype=jnp.float32)
    params = init_params(kp)

    p0, p1 = 0.2, 0.5  # dropout probs from ModelC.__init__(lr, p0, p1)

    # Training mode (dropout active).
    out = model_c_forward(x, params, p0=p0, p1=p1, seed=42, training=True)
    out = jax.block_until_ready(out)
    assert out.shape == (B, LABELS_COUNT)
    assert bool(jnp.all(jnp.isfinite(out)))
    # log_softmax rows sum to 1 in probability space.
    assert bool(jnp.allclose(jnp.sum(jnp.exp(out), axis=-1), 1.0, atol=1e-4))

    # Eval mode (dropout = identity) vs pure-JAX f32 reference (bf16 matmuls
    # in the kernel -> loose tolerance).
    out_eval = model_c_forward(x, params, p0=p0, p1=p1, training=False)
    out_eval = jax.block_until_ready(out_eval)
    ref = reference_forward(x, params)
    assert out_eval.shape == ref.shape
    assert bool(jnp.allclose(out_eval, ref, atol=0.15))

    print("KERNEL_OK")
</pallas_src>

<mosaic_0001>
module attributes {stable_mosaic.version = 11 : i64} {
  func.func @model_c_kernel(%arg0: i32, %arg1: memref<8x784xbf16, #tpu.memory_space<vmem>>, %arg2: memref<784x100xbf16, #tpu.memory_space<vmem>>, %arg3: memref<1x100xf32, #tpu.memory_space<vmem>>, %arg4: memref<100x50xbf16, #tpu.memory_space<vmem>>, %arg5: memref<1x50xf32, #tpu.memory_space<vmem>>, %arg6: memref<50x128xbf16, #tpu.memory_space<vmem>>, %arg7: memref<1x128xf32, #tpu.memory_space<vmem>>, %arg8: memref<8x100xi32, #tpu.memory_space<vmem>>, %arg9: memref<8x50xi32, #tpu.memory_space<vmem>>, %arg10: memref<8x128xf32, #tpu.memory_space<vmem>>) attributes {dimension_semantics = [#tpu.dimension_semantics<parallel>], iteration_bounds = array<i64: 1>, scalar_prefetch = 0 : i64, scratch_operands = 0 : i64, tpu.core_type = #tpu.core_type<tc>, window_params = [{transform_indices = @transform_0, window_bounds = array<i64: 8, 784>}, {pipeline_mode = #tpu.pipeline_mode<synchronous>, transform_indices = @transform_1, window_bounds = array<i64: 784, 100>}, {pipeline_mode = #tpu.pipeline_mode<synchronous>, transform_indices = @transform_2, window_bounds = array<i64: 1, 100>}, {pipeline_mode = #tpu.pipeline_mode<synchronous>, transform_indices = @transform_3, window_bounds = array<i64: 100, 50>}, {pipeline_mode = #tpu.pipeline_mode<synchronous>, transform_indices = @transform_4, window_bounds = array<i64: 1, 50>}, {pipeline_mode = #tpu.pipeline_mode<synchronous>, transform_indices = @transform_5, window_bounds = array<i64: 50, 128>}, {pipeline_mode = #tpu.pipeline_mode<synchronous>, transform_indices = @transform_6, window_bounds = array<i64: 1, 128>}, {transform_indices = @transform_7, window_bounds = array<i64: 8, 100>}, {transform_indices = @transform_8, window_bounds = array<i64: 8, 50>}, {transform_indices = @transform_9, window_bounds = array<i64: 8, 128>}]} {
    %c0 = arith.constant 0 : index
    %c0_0 = arith.constant 0 : index
    %0 = vector.load %arg1[%c0, %c0_0] : memref<8x784xbf16, #tpu.memory_space<vmem>>, vector<8x784xbf16>
    %c0_1 = arith.constant 0 : index
    %c0_2 = arith.constant 0 : index
    %1 = vector.load %arg2[%c0_1, %c0_2] : memref<784x100xbf16, #tpu.memory_space<vmem>>, vector<784x100xbf16>
    %cst = arith.constant dense<0.000000e+00> : vector<8x100xf32>
    %2 = tpu.matmul %0, %1, %cst {dimension_numbers = #tpu.dot_dimension_numbers<[1], [0], [0], [1], [0, 0, 1, 1], [], []>} : vector<8x784xbf16>, vector<784x100xbf16>, vector<8x100xf32> -> vector<8x100xf32>
    %c0_3 = arith.constant 0 : index
    %c0_4 = arith.constant 0 : index
    %3 = vector.load %arg3[%c0_3, %c0_4] : memref<1x100xf32, #tpu.memory_space<vmem>>, vector<1x100xf32>
    %4 = vector.broadcast %3 : vector<1x100xf32> to vector<8x100xf32>
    %5 = arith.addf %2, %4 : vector<8x100xf32>
    %cst_5 = arith.constant 0.000000e+00 : f32
    %6 = vector.broadcast %cst_5 : f32 to vector<8x100xf32>
    %7 = arith.maximumf %5, %6 : vector<8x100xf32>
    %c0_6 = arith.constant 0 : index
    %c0_7 = arith.constant 0 : index
    %8 = vector.load %arg8[%c0_6, %c0_7] : memref<8x100xi32, #tpu.memory_space<vmem>>, vector<8x100xi32>
    %c858993459_i32 = arith.constant 858993459 : i32
    %9 = vector.broadcast %c858993459_i32 : i32 to vector<8x100xi32>
    %10 = arith.cmpi uge, %8, %9 : vector<8x100xi32>
    %cst_8 = arith.constant 1.250000e+00 : f32
    %11 = vector.broadcast %cst_8 : f32 to vector<8x100xf32>
    %12 = arith.mulf %7, %11 : vector<8x100xf32>
    %cst_9 = arith.constant 0.000000e+00 : f32
    %13 = vector.broadcast %cst_9 : f32 to vector<8x100xf32>
    %14 = arith.select %10, %12, %13 : vector<8x100xi1>, vector<8x100xf32>
    %15 = arith.truncf %14 : vector<8x100xf32> to vector<8x100xbf16>
    %c0_10 = arith.constant 0 : index
    %c0_11 = arith.constant 0 : index
    %16 = vector.load %arg4[%c0_10, %c0_11] : memref<100x50xbf16, #tpu.memory_space<vmem>>, vector<100x50xbf16>
    %cst_12 = arith.constant dense<0.000000e+00> : vector<8x50xf32>
    %17 = tpu.matmul %15, %16, %cst_12 {dimension_numbers = #tpu.dot_dimension_numbers<[1], [0], [0], [1], [0, 0, 1, 1], [], []>} : vector<8x100xbf16>, vector<100x50xbf16>, vector<8x50xf32> -> vector<8x50xf32>
    %c0_13 = arith.constant 0 : index
    %c0_14 = arith.constant 0 : index
    %18 = vector.load %arg5[%c0_13, %c0_14] : memref<1x50xf32, #tpu.memory_space<vmem>>, vector<1x50xf32>
    %19 = vector.broadcast %18 : vector<1x50xf32> to vector<8x50xf32>
    %20 = arith.addf %17, %19 : vector<8x50xf32>
    %cst_15 = arith.constant 0.000000e+00 : f32
    %21 = vector.broadcast %cst_15 : f32 to vector<8x50xf32>
    %22 = arith.maximumf %20, %21 : vector<8x50xf32>
    %c0_16 = arith.constant 0 : index
    %c0_17 = arith.constant 0 : index
    %23 = vector.load %arg9[%c0_16, %c0_17] : memref<8x50xi32, #tpu.memory_space<vmem>>, vector<8x50xi32>
    %c-2147483648_i32 = arith.constant -2147483648 : i32
    %24 = vector.broadcast %c-2147483648_i32 : i32 to vector<8x50xi32>
    %25 = arith.cmpi uge, %23, %24 : vector<8x50xi32>
    %cst_18 = arith.constant 2.000000e+00 : f32
    %26 = vector.broadcast %cst_18 : f32 to vector<8x50xf32>
    %27 = arith.mulf %22, %26 : vector<8x50xf32>
    %cst_19 = arith.constant 0.000000e+00 : f32
    %28 = vector.broadcast %cst_19 : f32 to vector<8x50xf32>
    %29 = arith.select %25, %27, %28 : vector<8x50xi1>, vector<8x50xf32>
    %30 = arith.truncf %29 : vector<8x50xf32> to vector<8x50xbf16>
    %c0_20 = arith.constant 0 : index
    %c0_21 = arith.constant 0 : index
    %31 = vector.load %arg6[%c0_20, %c0_21] : memref<50x128xbf16, #tpu.memory_space<vmem>>, vector<50x128xbf16>
    %cst_22 = arith.constant dense<0.000000e+00> : vector<8x128xf32>
    %32 = tpu.matmul %30, %31, %cst_22 {dimension_numbers = #tpu.dot_dimension_numbers<[1], [0], [0], [1], [0, 0, 1, 1], [], []>} : vector<8x50xbf16>, vector<50x128xbf16>, vector<8x128xf32> -> vector<8x128xf32>
    %c0_23 = arith.constant 0 : index
    %c0_24 = arith.constant 0 : index
    %33 = vector.load %arg7[%c0_23, %c0_24] : memref<1x128xf32, #tpu.memory_space<vmem>>, vector<1x128xf32>
    %34 = vector.broadcast %33 : vector<1x128xf32> to vector<8x128xf32>
    %35 = arith.addf %32, %34 : vector<8x128xf32>
    %36 = tpu.iota {dimensions = array<i32: 1>} : vector<8x128xi32>
    %c10_i32 = arith.constant 10 : i32
    %37 = vector.broadcast %c10_i32 : i32 to vector<8x128xi32>
    %38 = arith.cmpi slt, %36, %37 : vector<8x128xi32>
    %cst_25 = arith.constant -1.000000e+30 : f32
    %39 = vector.broadcast %cst_25 : f32 to vector<8x128xf32>
    %40 = arith.select %38, %35, %39 : vector<8x128xi1>, vector<8x128xf32>
    %cst_26 = arith.constant dense<0xFF800000> : vector<8xf32>
    %41 = vector.multi_reduction <maximumf>, %40, %cst_26 [1] : vector<8x128xf32> to vector<8xf32>
    %42 = vector.shape_cast %41 : vector<8xf32> to vector<8x1xf32>
    %43 = vector.broadcast %42 : vector<8x1xf32> to vector<8x128xf32>
    %44 = arith.subf %40, %43 : vector<8x128xf32>
    %45 = math.exp %44 : vector<8x128xf32>
    %cst_27 = arith.constant dense<0.000000e+00> : vector<8xf32>
    %46 = vector.multi_reduction <add>, %45, %cst_27 [1] : vector<8x128xf32> to vector<8xf32>
    %47 = vector.shape_cast %46 : vector<8xf32> to vector<8x1xf32>
    %48 = math.log %47 : vector<8x1xf32>
    %49 = vector.broadcast %48 : vector<8x1xf32> to vector<8x128xf32>
    %50 = arith.subf %44, %49 : vector<8x128xf32>
    %c0_28 = arith.constant 0 : index
    %c0_29 = arith.constant 0 : index
    %51 = vector.load %arg10[%c0_28, %c0_29] : memref<8x128xf32, #tpu.memory_space<vmem>>, vector<8x128xf32>
    tpu.vector_store %arg10[%c0_28, %c0_29], %50 {strides = array<i32>} : memref<8x128xf32, #tpu.memory_space<vmem>>, vector<8x128xf32>,
    return
  }
  func.func @transform_0(%arg0: i32) -> (i32, i32) {
    %c0_i32 = arith.constant 0 : i32
    %c0_i32_0 = arith.constant 0 : i32
    return %arg0, %c0_i32 : i32, i32
  }
  func.func @transform_1(%arg0: i32) -> (i32, i32) {
    %c0_i32 = arith.constant 0 : i32
    %c0_i32_0 = arith.constant 0 : i32
    %c0_i32_1 = arith.constant 0 : i32
    return %c0_i32, %c0_i32_0 : i32, i32
  }
  func.func @transform_2(%arg0: i32) -> (i32, i32) {
    %c0_i32 = arith.constant 0 : i32
    %c0_i32_0 = arith.constant 0 : i32
    %c0_i32_1 = arith.constant 0 : i32
    return %c0_i32, %c0_i32_0 : i32, i32
  }
  func.func @transform_3(%arg0: i32) -> (i32, i32) {
    %c0_i32 = arith.constant 0 : i32
    %c0_i32_0 = arith.constant 0 : i32
    %c0_i32_1 = arith.constant 0 : i32
    return %c0_i32, %c0_i32_0 : i32, i32
  }
  func.func @transform_4(%arg0: i32) -> (i32, i32) {
    %c0_i32 = arith.constant 0 : i32
    %c0_i32_0 = arith.constant 0 : i32
    %c0_i32_1 = arith.constant 0 : i32
    return %c0_i32, %c0_i32_0 : i32, i32
  }
  func.func @transform_5(%arg0: i32) -> (i32, i32) {
    %c0_i32 = arith.constant 0 : i32
    %c0_i32_0 = arith.constant 0 : i32
    %c0_i32_1 = arith.constant 0 : i32
    return %c0_i32, %c0_i32_0 : i32, i32
  }
  func.func @transform_6(%arg0: i32) -> (i32, i32) {
    %c0_i32 = arith.constant 0 : i32
    %c0_i32_0 = arith.constant 0 : i32
    %c0_i32_1 = arith.constant 0 : i32
    return %c0_i32, %c0_i32_0 : i32, i32
  }
  func.func @transform_7(%arg0: i32) -> (i32, i32) {
    %c0_i32 = arith.constant 0 : i32
    %c0_i32_0 = arith.constant 0 : i32
    return %arg0, %c0_i32 : i32, i32
  }
  func.func @transform_8(%arg0: i32) -> (i32, i32) {
    %c0_i32 = arith.constant 0 : i32
    %c0_i32_0 = arith.constant 0 : i32
    return %arg0, %c0_i32 : i32, i32
  }
  func.func @transform_9(%arg0: i32) -> (i32, i32) {
    %c0_i32 = arith.constant 0 : i32
    %c0_i32_0 = arith.constant 0 : i32
    return %arg0, %c0_i32 : i32, i32
  }
}

</mosaic_0001>

<llo_original>
// kernel: tpu_custom_call.1
$region0: #{tpu_custom_call.1}
  #allocation0 [shape = 'u32[]', space=smem, size = 0x4, offset = 0x4, fixed_abs, tag = 'smem constant byte address 0x4 - core index']
  #allocation1 [shape = 'u32[144,128]{1,0:T(1,128)}', space=vmem, size = 0x12000, scoped, tag = 'internal scratch']
  %s0 = inlined_call_operand.vmem [shape: bf16[8,784], index: 0, kind: input, shape index: {}]
  %s1 = inlined_call_operand.vmem [shape: bf16[784,100], index: 1, kind: input, shape index: {}]
  %s2 = inlined_call_operand.vmem [shape: f32[1,100], index: 2, kind: input, shape index: {}]
  %s3 = inlined_call_operand.vmem [shape: bf16[100,50], index: 3, kind: input, shape index: {}]
  %s4 = inlined_call_operand.vmem [shape: f32[1,50], index: 4, kind: input, shape index: {}]
  %s5 = inlined_call_operand.vmem [shape: bf16[50,128], index: 5, kind: input, shape index: {}]
  %s6 = inlined_call_operand.vmem [shape: f32[1,128], index: 6, kind: input, shape index: {}]
  %s7 = inlined_call_operand.vmem [shape: u32[8,100], index: 7, kind: input, shape index: {}]
  %s8 = inlined_call_operand.vmem [shape: u32[8,50], index: 8, kind: input, shape index: {}]
  %s9 = inlined_call_operand.hbm [shape: f32[8,128], index: 9, kind: output, shape index: {}]
  %s10 = sld [smem:[#allocation0]]
  $region46: #{tpu_custom_call.1} parent=0
    _
  %s12 = ssub.s32 1, %s10
  %s13 = scalar_select 0, %s12, %s10
  $region1: #{tpu_custom_call.1} parent=0
    #allocation2 [shape = 'u8[4096]{0}', space=vmem, size = 0x1000, scoped, tag = 'output window, operand 0, single buffered']
    #allocation3 [shape = 's32[1]{0}', space=sflag, size = 0x4, scoped, tag = 'scoped memory for tpu_custom_call.1']
    %14 = vsyncpa [#allocation3], 0
    // Predicated region
    $region2: #{tpu_custom_call.1} parent=1 // pred_check
      _
    $region3: #{tpu_custom_call.1} parent=1 // pred_check_branch
      %16 = sbr.rel (0) target = $region5
    $region4: #{tpu_custom_call.1} parent=1 // pred_region
      _
    $region5: #{tpu_custom_call.1} parent=1 // pred_fallthru
      _
    // Predicated region
    $region6: #{tpu_custom_call.1} parent=1 // pred_check
      _
    $region7: #{tpu_custom_call.1} parent=1 // pred_check_branch
      %18 = sbr.rel (0) target = $region9
    $region8: #{tpu_custom_call.1} parent=1 // pred_region
      _
    $region9: #{tpu_custom_call.1} parent=1 // pred_fallthru
      _
    // Predicated region
    $region10: #{tpu_custom_call.1} parent=1 // pred_check
      _
    $region11: #{tpu_custom_call.1} parent=1 // pred_check_branch
      %20 = sbr.rel (0) target = $region13
    $region12: #{tpu_custom_call.1} parent=1 // pred_region
      _
    $region13: #{tpu_custom_call.1} parent=1 // pred_fallthru
      _
    // Predicated region
    $region14: #{tpu_custom_call.1} parent=1 // pred_check
      _
    $region15: #{tpu_custom_call.1} parent=1 // pred_check_branch
      %22 = sbr.rel (0) target = $region17
    $region16: #{tpu_custom_call.1} parent=1 // pred_region
      _
    $region17: #{tpu_custom_call.1} parent=1 // pred_fallthru
      _
    // Predicated region
    $region18: #{tpu_custom_call.1} parent=1 // pred_check
      _
    $region19: #{tpu_custom_call.1} parent=1 // pred_check_branch
      %24 = sbr.rel (0) target = $region21
    $region20: #{tpu_custom_call.1} parent=1 // pred_region
      _
    $region21: #{tpu_custom_call.1} parent=1 // pred_fallthru
      _
    // Predicated region
    $region22: #{tpu_custom_call.1} parent=1 // pred_check
      _
    $region23: #{tpu_custom_call.1} parent=1 // pred_check_branch
      %26 = sbr.rel (0) target = $region25
    $region24: #{tpu_custom_call.1} parent=1 // pred_region
      _
    $region25: #{tpu_custom_call.1} parent=1 // pred_fallthru
      _
    // Predicated region
    $region26: #{tpu_custom_call.1} parent=1 // pred_check
      _
    $region27: #{tpu_custom_call.1} parent=1 // pred_check_branch
      %28 = sbr.rel (0) target = $region29
    $region28: #{tpu_custom_call.1} parent=1 // pred_region
      _
    $region29: #{tpu_custom_call.1} parent=1 // pred_fallthru
      _
    // Predicated region
    $region30: #{tpu_custom_call.1} parent=1 // pred_check
      _
    $region31: #{tpu_custom_call.1} parent=1 // pred_check_branch
      %30 = sbr.rel (0) target = $region33
    $region32: #{tpu_custom_call.1} parent=1 // pred_region
      _
    $region33: #{tpu_custom_call.1} parent=1 // pred_fallthru
      _
    // Predicated region
    $region34: #{tpu_custom_call.1} parent=1 // pred_check
      _
    $region35: #{tpu_custom_call.1} parent=1 // pred_check_branch
      %32 = sbr.rel (0) target = $region37
    $region36: #{tpu_custom_call.1} parent=1 // pred_region
      _
    $region37: #{tpu_custom_call.1} parent=1 // pred_fallthru
      _
    %v34 = vld [vmem:[%s0] sm:$0xff]
    %v35 = vld [vmem:[%s0 + $0x8] sm:$0xff]
    %v36 = vld [vmem:[%s0 + $0x10] sm:$0xff]
    %v37 = vld [vmem:[%s0 + $0x18] sm:$0xf]
    %v38 = vld [vmem:[%s1] sm:$0xf]
    %v39 = vld [vmem:[%s1 + $0x4] sm:$0xf]
    %v40 = vld [vmem:[%s1 + $0x8] sm:$0xf]
    %v41 = vld [vmem:[%s1 + $0xc] sm:$0xf]
    %v42 = vld [vmem:[%s1 + $0x10] sm:$0xf]
    %v43 = vld [vmem:[%s1 + $0x14] sm:$0xf]
    %v44 = vld [vmem:[%s1 + $0x18] sm:$0xf]
    %v45 = vld [vmem:[%s1 + $0x1c] sm:$0xf]
    %v46 = vld [vmem:[%s1 + $0x20] sm:$0xf]
    %v47 = vld [vmem:[%s1 + $0x24] sm:$0xf]
    %v48 = vld [vmem:[%s1 + $0x28] sm:$0xf]
    %v49 = vld [vmem:[%s1 + $0x2c] sm:$0xf]
    %v50 = vld [vmem:[%s1 + $0x30] sm:$0xf]
    %v51 = vld [vmem:[%s1 + $0x34] sm:$0xf]
    %v52 = vld [vmem:[%s1 + $0x38] sm:$0xf]
    %v53 = vld [vmem:[%s1 + $0x3c] sm:$0xf]
    %v54 = vld [vmem:[%s1 + $0x40] sm:$0xf]
    %v55 = vld [vmem:[%s1 + $0x44] sm:$0xf]
    %v56 = vld [vmem:[%s1 + $0x48] sm:$0xf]
    %v57 = vld [vmem:[%s1 + $0x4c] sm:$0xf]
    %v58 = vld [vmem:[%s1 + $0x50] sm:$0xf]
    %v59 = vld [vmem:[%s1 + $0x54] sm:$0xf]
    %v60 = vld [vmem:[%s1 + $0x58] sm:$0xf]
    %v61 = vld [vmem:[%s1 + $0x5c] sm:$0xf]
    %v62 = vld [vmem:[%s1 + $0x60] sm:$0xf]
    %v63 = vld [vmem:[%s1 + $0x64] sm:$0xf]
    %v64 = vld [vmem:[%s1 + $0x68] sm:$0xf]
    %v65 = vld [vmem:[%s1 + $0x6c] sm:$0xf]
    %v66 = vld [vmem:[%s1 + $0x70] sm:$0xf]
    %v67 = vld [vmem:[%s1 + $0x74] sm:$0xf]
    %v68 = vld [vmem:[%s1 + $0x78] sm:$0xf]
    %v69 = vld [vmem:[%s1 + $0x7c] sm:$0xf]
    %v70 = vld [vmem:[%s1 + $0x80] sm:$0xf]
    %v71 = vld [vmem:[%s1 + $0x84] sm:$0xf]
    %v72 = vld [vmem:[%s1 + $0x88] sm:$0xf]
    %v73 = vld [vmem:[%s1 + $0x8c] sm:$0xf]
    %v74 = vld [vmem:[%s1 + $0x90] sm:$0xf]
    %v75 = vld [vmem:[%s1 + $0x94] sm:$0xf]
    %v76 = vld [vmem:[%s1 + $0x98] sm:$0xf]
    %v77 = vld [vmem:[%s1 + $0x9c] sm:$0xf]
    %v78 = vld [vmem:[%s1 + $0xa0] sm:$0xf]
    %v79 = vld [vmem:[%s1 + $0xa4] sm:$0xf]
    %v80 = vld [vmem:[%s1 + $0xa8] sm:$0xf]
    %v81 = vld [vmem:[%s1 + $0xac] sm:$0xf]
    %v82 = vld [vmem:[%s1 + $0xb0] sm:$0xf]
    %v83 = vld [vmem:[%s1 + $0xb4] sm:$0xf]
    %v84 = vld [vmem:[%s1 + $0xb8] sm:$0xf]
    %v85 = vld [vmem:[%s1 + $0xbc] sm:$0xf]
    %v86 = vld [vmem:[%s1 + $0xc0] sm:$0xf]
    %v87 = vld [vmem:[%s1 + $0xc4] sm:$0xf]
    %v88 = vld [vmem:[%s1 + $0xc8] sm:$0xf]
    %v89 = vld [vmem:[%s1 + $0xcc] sm:$0xf]
    %v90 = vld [vmem:[%s1 + $0xd0] sm:$0xf]
    %v91 = vld [vmem:[%s1 + $0xd4] sm:$0xf]
    %v92 = vld [vmem:[%s1 + $0xd8] sm:$0xf]
    %v93 = vld [vmem:[%s1 + $0xdc] sm:$0xf]
    %v94 = vld [vmem:[%s1 + $0xe0] sm:$0xf]
    %v95 = vld [vmem:[%s1 + $0xe4] sm:$0xf]
    %v96 = vld [vmem:[%s1 + $0xe8] sm:$0xf]
    %v97 = vld [vmem:[%s1 + $0xec] sm:$0xf]
    %v98 = vld [vmem:[%s1 + $0xf0] sm:$0xf]
    %v99 = vld [vmem:[%s1 + $0xf4] sm:$0xf]
    %v100 = vld [vmem:[%s1 + $0xf8] sm:$0xf]
    %v101 = vld [vmem:[%s1 + $0xfc] sm:$0xf]
    %v102 = vld [vmem:[%s1 + $0x100] sm:$0xf]
    %v103 = vld [vmem:[%s1 + $0x104] sm:$0xf]
    %v104 = vld [vmem:[%s1 + $0x108] sm:$0xf]
    %v105 = vld [vmem:[%s1 + $0x10c] sm:$0xf]
    %v106 = vld [vmem:[%s1 + $0x110] sm:$0xf]
    %v107 = vld [vmem:[%s1 + $0x114] sm:$0xf]
    %v108 = vld [vmem:[%s1 + $0x118] sm:$0xf]
    %v109 = vld [vmem:[%s1 + $0x11c] sm:$0xf]
    %v110 = vld [vmem:[%s1 + $0x120] sm:$0xf]
    %v111 = vld [vmem:[%s1 + $0x124] sm:$0xf]
    %v112 = vld [vmem:[%s1 + $0x128] sm:$0xf]
    %v113 = vld [vmem:[%s1 + $0x12c] sm:$0xf]
    %v114 = vld [vmem:[%s1 + $0x130] sm:$0xf]
    %v115 = vld [vmem:[%s1 + $0x134] sm:$0xf]
    %v116 = vld [vmem:[%s1 + $0x138] sm:$0xf]
    %v117 = vld [vmem:[%s1 + $0x13c] sm:$0xf]
    %v118 = vld [vmem:[%s1 + $0x140] sm:$0xf]
    %v119 = vld [vmem:[%s1 + $0x144] sm:$0xf]
    %v120 = vld [vmem:[%s1 + $0x148] sm:$0xf]
    %v121 = vld [vmem:[%s1 + $0x14c] sm:$0xf]
    %v122 = vld [vmem:[%s1 + $0x150] sm:$0xf]
    %v123 = vld [vmem:[%s1 + $0x154] sm:$0xf]
    %v124 = vld [vmem:[%s1 + $0x158] sm:$0xf]
    %v125 = vld [vmem:[%s1 + $0x15c] sm:$0xf]
    %v126 = vld [vmem:[%s1 + $0x160] sm:$0xf]
    %v127 = vld [vmem:[%s1 + $0x164] sm:$0xf]
    %v128 = vld [vmem:[%s1 + $0x168] sm:$0xf]
    %v129 = vld [vmem:[%s1 + $0x16c] sm:$0xf]
    %v130 = vld [vmem:[%s1 + $0x170] sm:$0xf]
    %v131 = vld [vmem:[%s1 + $0x174] sm:$0xf]
    %v132 = vld [vmem:[%s1 + $0x178] sm:$0xf]
    %v133 = vld [vmem:[%s1 + $0x17c] sm:$0xf]
    %v134 = vld [vmem:[%s1 + $0x180] sm:$0xf]
    %v135 = vld [vmem:[%s1 + $0x184] sm:$0xf]
    %v136 = vld [vmem:[%s2] sm:$0x1]
    %v138 = vlaneseq
    %v139 = vshrl.u32 %v138, 7
    %v140 = vsub.s32 0, %v139
    %v141 = vrot.slane %v136, %v140
    %v147 = vunpack.c.l.b16 %v34
    %v148 = vunpack.c.h.b16 %v34
    %v149 = vunpack.c.l.b16 %v35
    %v150 = vunpack.c.h.b16 %v35
    %v151 = vunpack.c.l.b16 %v36
    %v152 = vunpack.c.h.b16 %v36
    %v153 = vunpack.c.l.b16 %v37
    %v154 = vpack.c.b16 %v147, %v147
    %v155 = vpack.c.b16 %v148, %v148
    %v156 = vpack.c.b16 %v149, %v149
    %v157 = vpack.c.b16 %v150, %v150
    %v158 = vpack.c.b16 %v151, %v151
    %v159 = vpack.c.b16 %v152, %v152
    %v160 = vpack.c.b16 %v153, %v153
    %v265 = vunpack.c.l.b16 %v38
    %v266 = vunpack.c.l.b16 %v39
    %v267 = vunpack.c.l.b16 %v40
    %v268 = vunpack.c.l.b16 %v41
    %v269 = vunpack.c.l.b16 %v42
    %v270 = vunpack.c.l.b16 %v43
    %v271 = vunpack.c.l.b16 %v44
    %v272 = vunpack.c.l.b16 %v45
    %v273 = vunpack.c.l.b16 %v46
    %v274 = vunpack.c.l.b16 %v47
    %v275 = vunpack.c.l.b16 %v48
    %v276 = vunpack.c.l.b16 %v49
    %v277 = vunpack.c.l.b16 %v50
    %v278 = vunpack.c.l.b16 %v51
    %v279 = vunpack.c.l.b16 %v52
    %v280 = vunpack.c.l.b16 %v53
    %v281 = vunpack.c.l.b16 %v54
    %v282 = vunpack.c.l.b16 %v55
    %v283 = vunpack.c.l.b16 %v56
    %v284 = vunpack.c.l.b16 %v57
    %v285 = vunpack.c.l.b16 %v58
    %v286 = vunpack.c.l.b16 %v59
    %v287 = vunpack.c.l.b16 %v60
    %v288 = vunpack.c.l.b16 %v61
    %v289 = vunpack.c.l.b16 %v62
    %v290 = vunpack.c.l.b16 %v63
    %v291 = vunpack.c.l.b16 %v64
    %v292 = vunpack.c.l.b16 %v65
    %v293 = vunpack.c.l.b16 %v66
    %v294 = vunpack.c.l.b16 %v67
    %v295 = vunpack.c.l.b16 %v68
    %v296 = vunpack.c.l.b16 %v69
    %v297 = vunpack.c.l.b16 %v70
    %v298 = vunpack.c.l.b16 %v71
    %v299 = vunpack.c.l.b16 %v72
    %v300 = vunpack.c.l.b16 %v73
    %v301 = vunpack.c.l.b16 %v74
    %v302 = vunpack.c.l.b16 %v75
    %v303 = vunpack.c.l.b16 %v76
    %v304 = vunpack.c.l.b16 %v77
    %v305 = vunpack.c.l.b16 %v78
    %v306 = vunpack.c.l.b16 %v79
    %v307 = vunpack.c.l.b16 %v80
    %v308 = vunpack.c.l.b16 %v81
    %v309 = vunpack.c.l.b16 %v82
    %v310 = vunpack.c.l.b16 %v83
    %v311 = vunpack.c.l.b16 %v84
    %v312 = vunpack.c.l.b16 %v85
    %v313 = vunpack.c.l.b16 %v86
    %v314 = vunpack.c.l.b16 %v87
    %v315 = vunpack.c.l.b16 %v88
    %v316 = vunpack.c.l.b16 %v89
    %v317 = vunpack.c.l.b16 %v90
    %v318 = vunpack.c.l.b16 %v91
    %v319 = vunpack.c.l.b16 %v92
    %v320 = vunpack.c.l.b16 %v93
    %v321 = vunpack.c.l.b16 %v94
    %v322 = vunpack.c.l.b16 %v95
    %v323 = vunpack.c.l.b16 %v96
    %v324 = vunpack.c.l.b16 %v97
    %v325 = vunpack.c.l.b16 %v98
    %v326 = vunpack.c.l.b16 %v99
    %v327 = vunpack.c.l.b16 %v100
    %v328 = vunpack.c.l.b16 %v101
    %v329 = vunpack.c.l.b16 %v102
    %v330 = vunpack.c.l.b16 %v103
    %v331 = vunpack.c.l.b16 %v104
    %v332 = vunpack.c.l.b16 %v105
    %v333 = vunpack.c.l.b16 %v106
    %v334 = vunpack.c.l.b16 %v107
    %v335 = vunpack.c.l.b16 %v108
    %v336 = vunpack.c.l.b16 %v109
    %v337 = vunpack.c.l.b16 %v110
    %v338 = vunpack.c.l.b16 %v111
    %v339 = vunpack.c.l.b16 %v112
    %v340 = vunpack.c.l.b16 %v113
    %v341 = vunpack.c.l.b16 %v114
    %v342 = vunpack.c.l.b16 %v115
    %v343 = vunpack.c.l.b16 %v116
    %v344 = vunpack.c.l.b16 %v117
    %v345 = vunpack.c.l.b16 %v118
    %v346 = vunpack.c.l.b16 %v119
    %v347 = vunpack.c.l.b16 %v120
    %v348 = vunpack.c.l.b16 %v121
    %v349 = vunpack.c.l.b16 %v122
    %v350 = vunpack.c.l.b16 %v123
    %v351 = vunpack.c.l.b16 %v124
    %v352 = vunpack.c.l.b16 %v125
    %v353 = vunpack.c.l.b16 %v126
    %v354 = vunpack.c.l.b16 %v127
    %v355 = vunpack.c.l.b16 %v128
    %v356 = vunpack.c.l.b16 %v129
    %v357 = vunpack.c.l.b16 %v130
    %v358 = vunpack.c.l.b16 %v131
    %v359 = vunpack.c.l.b16 %v132
    %v360 = vunpack.c.l.b16 %v133
    %v361 = vunpack.c.l.b16 %v134
    %v362 = vunpack.c.l.b16 %v135
    %v363 = vpack.c.b16 %v266, %v265
    %v364 = vpack.c.b16 %v268, %v267
    %v365 = vpack.c.b16 %v270, %v269
    %v366 = vpack.c.b16 %v272, %v271
    %v367 = vpack.c.b16 %v274, %v273
    %v368 = vpack.c.b16 %v276, %v275
    %v369 = vpack.c.b16 %v278, %v277
    %v370 = vpack.c.b16 %v280, %v279
    %v371 = vpack.c.b16 %v282, %v281
    %v372 = vpack.c.b16 %v284, %v283
    %v373 = vpack.c.b16 %v286, %v285
    %v374 = vpack.c.b16 %v288, %v287
    %v375 = vpack.c.b16 %v290, %v289
    %v376 = vpack.c.b16 %v292, %v291
    %v377 = vpack.c.b16 %v294, %v293
    %v378 = vpack.c.b16 %v296, %v295
    %v379 = vpack.c.b16 %v298, %v297
    %v380 = vpack.c.b16 %v300, %v299
    %v381 = vpack.c.b16 %v302, %v301
    %v382 = vpack.c.b16 %v304, %v303
    %v383 = vpack.c.b16 %v306, %v305
    %v384 = vpack.c.b16 %v308, %v307
    %v385 = vpack.c.b16 %v310, %v309
    %v386 = vpack.c.b16 %v312, %v311
    %v387 = vpack.c.b16 %v314, %v313
    %v388 = vpack.c.b16 %v316, %v315
    %v389 = vpack.c.b16 %v318, %v317
    %v390 = vpack.c.b16 %v320, %v319
    %v391 = vpack.c.b16 %v322, %v321
    %v392 = vpack.c.b16 %v324, %v323
    %v393 = vpack.c.b16 %v326, %v325
    %v394 = vpack.c.b16 %v328, %v327
    %v395 = vpack.c.b16 %v330, %v329
    %v396 = vpack.c.b16 %v332, %v331
    %v397 = vpack.c.b16 %v334, %v333
    %v398 = vpack.c.b16 %v336, %v335
    %v399 = vpack.c.b16 %v338, %v337
    %v400 = vpack.c.b16 %v340, %v339
    %v401 = vpack.c.b16 %v342, %v341
    %v402 = vpack.c.b16 %v344, %v343
    %v403 = vpack.c.b16 %v346, %v345
    %v404 = vpack.c.b16 %v348, %v347
    %v405 = vpack.c.b16 %v350, %v349
    %v406 = vpack.c.b16 %v352, %v351
    %v407 = vpack.c.b16 %v354, %v353
    %v408 = vpack.c.b16 %v356, %v355
    %v409 = vpack.c.b16 %v358, %v357
    %v410 = vpack.c.b16 %v360, %v359
    %v411 = vpack.c.b16 %v362, %v361
    %vm461 = vcmask 130048
    %v463 = vsel %vm461, %v160, 0
    %465 = vmatprep.subr.bf16.mxu0 0
    %466 = vmatpush1.bf16.msra.mxu0 %v363
    %467 = vmatprep.subr.bf16.mxu0 0
    %468 = vmatpush1.bf16.msra.mxu0 %v364
    %469 = vmatprep.subr.bf16.mxu0 0
    %470 = vmatpush1.bf16.msra.mxu0 %v365
    %471 = vmatprep.subr.bf16.mxu0 0
    %472 = vmatpush1.bf16.msra.mxu0 %v366
    %473 = vmatprep.subr.bf16.mxu0 0
    %474 = vmatpush1.bf16.msra.mxu0 %v367
    %475 = vmatprep.subr.bf16.mxu0 0
    %476 = vmatpush1.bf16.msra.mxu0 %v368
    %477 = vmatprep.subr.bf16.mxu0 0
    %478 = vmatpush1.bf16.msra.mxu0 %v369
    %479 = vmatprep.subr.bf16.mxu0 0
    %480 = vmatpush1.bf16.msra.mxu0 %v370
    %481 = vmatprep.subr.bf16.mxu0 0
    %482 = vmatpush1.bf16.msra.mxu0 %v371
    %483 = vmatprep.subr.bf16.mxu0 0
    %484 = vmatpush1.bf16.msra.mxu0 %v372
    %485 = vmatprep.subr.bf16.mxu0 0
    %486 = vmatpush1.bf16.msra.mxu0 %v373
    %487 = vmatprep.subr.bf16.mxu0 0
    %488 = vmatpush1.bf16.msra.mxu0 %v374
    %489 = vmatprep.subr.bf16.mxu0 0
    %490 = vmatpush1.bf16.msra.mxu0 %v375
    %491 = vmatprep.subr.bf16.mxu0 0
    %492 = vmatpush1.bf16.msra.mxu0 %v376
    %493 = vmatprep.subr.bf16.mxu0 0
    %494 = vmatpush1.bf16.msra.mxu0 %v377
    %495 = vmatprep.subr.bf16.mxu0 0
    %496 = vmatpush1.bf16.msra.mxu0 %v378
    %497 = vmatprep.mubr.bf16.mxu0 %v155
    %498 = vmatmul.mubr.bf16.gmra.mrb[0].mxu0 %v154
    %v499 = vpop.f32.mrb[0].mxu0
    %v500 = vadd.f32 %v141, %v499
    %v501 = vpop.f32.mrb[0].mxu0
    %v502 = vpop.f32.mrb[0].mxu0
    %v503 = vpop.f32.mrb[0].mxu0
    %504 = vdwg.mxu0
    %505 = vmatprep.subr.bf16.mxu0 0
    %506 = vmatpush1.bf16.msra.mxu0 %v379
    %507 = vmatprep.subr.bf16.mxu0 0
    %508 = vmatpush1.bf16.msra.mxu0 %v380
    %509 = vmatprep.subr.bf16.mxu0 0
    %510 = vmatpush1.bf16.msra.mxu0 %v381
    %511 = vmatprep.subr.bf16.mxu0 0
    %512 = vmatpush1.bf16.msra.mxu0 %v382
    %513 = vmatprep.subr.bf16.mxu0 0
    %514 = vmatpush1.bf16.msra.mxu0 %v383
    %515 = vmatprep.subr.bf16.mxu0 0
    %516 = vmatpush1.bf16.msra.mxu0 %v384
    %517 = vmatprep.subr.bf16.mxu0 0
    %518 = vmatpush1.bf16.msra.mxu0 %v385
    %519 = vmatprep.subr.bf16.mxu0 0
    %520 = vmatpush1.bf16.msra.mxu0 %v386
    %521 = vmatprep.subr.bf16.mxu0 0
    %522 = vmatpush1.bf16.msra.mxu0 %v387
    %523 = vmatprep.subr.bf16.mxu0 0
    %524 = vmatpush1.bf16.msra.mxu0 %v388
    %525 = vmatprep.subr.bf16.mxu0 0
    %526 = vmatpush1.bf16.msra.mxu0 %v389
    %527 = vmatprep.subr.bf16.mxu0 0
    %528 = vmatpush1.bf16.msra.mxu0 %v390
    %529 = vmatprep.subr.bf16.mxu0 0
    %530 = vmatpush1.bf16.msra.mxu0 %v391
    %531 = vmatprep.subr.bf16.mxu0 0
    %532 = vmatpush1.bf16.msra.mxu0 %v392
    %533 = vmatprep.subr.bf16.mxu0 0
    %534 = vmatpush1.bf16.msra.mxu0 %v393
    %535 = vmatprep.subr.bf16.mxu0 0
    %536 = vmatpush1.bf16.msra.mxu0 %v394
    %537 = vmatprep.mubr.bf16.mxu0 %v157
    %538 = vmatmul.mubr.bf16.gmra.mrb[0].mxu0 %v156
    %v539 = vpop.f32.mrb[0].mxu0
    %v540 = vadd.f32 %v500, %v539
    %v541 = vpop.f32.mrb[0].mxu0
    %v542 = vpop.f32.mrb[0].mxu0
    %v543 = vpop.f32.mrb[0].mxu0
    %544 = vdwg.mxu0
    %545 = vmatprep.subr.bf16.mxu0 0
    %546 = vmatpush1.bf16.msra.mxu0 %v395
    %547 = vmatprep.subr.bf16.mxu0 0
    %548 = vmatpush1.bf16.msra.mxu0 %v396
    %549 = vmatprep.subr.bf16.mxu0 0
    %550 = vmatpush1.bf16.msra.mxu0 %v397
    %551 = vmatprep.subr.bf16.mxu0 0
    %552 = vmatpush1.bf16.msra.mxu0 %v398
    %553 = vmatprep.subr.bf16.mxu0 0
    %554 = vmatpush1.bf16.msra.mxu0 %v399
    %555 = vmatprep.subr.bf16.mxu0 0
    %556 = vmatpush1.bf16.msra.mxu0 %v400
    %557 = vmatprep.subr.bf16.mxu0 0
    %558 = vmatpush1.bf16.msra.mxu0 %v401
    %559 = vmatprep.subr.bf16.mxu0 0
    %560 = vmatpush1.bf16.msra.mxu0 %v402
    %561 = vmatprep.subr.bf16.mxu0 0
    %562 = vmatpush1.bf16.msra.mxu0 %v403
    %563 = vmatprep.subr.bf16.mxu0 0
    %564 = vmatpush1.bf16.msra.mxu0 %v404
    %565 = vmatprep.subr.bf16.mxu0 0
    %566 = vmatpush1.bf16.msra.mxu0 %v405
    %567 = vmatprep.subr.bf16.mxu0 0
    %568 = vmatpush1.bf16.msra.mxu0 %v406
    %569 = vmatprep.subr.bf16.mxu0 0
    %570 = vmatpush1.bf16.msra.mxu0 %v407
    %571 = vmatprep.subr.bf16.mxu0 0
    %572 = vmatpush1.bf16.msra.mxu0 %v408
    %573 = vmatprep.subr.bf16.mxu0 0
    %574 = vmatpush1.bf16.msra.mxu0 %v409
    %575 = vmatprep.subr.bf16.mxu0 0
    %576 = vmatpush1.bf16.msra.mxu0 %v410
    %577 = vmatprep.mubr.bf16.mxu0 %v159
    %578 = vmatmul.mubr.bf16.gmra.mrb[0].mxu0 %v158
    %v579 = vpop.f32.mrb[0].mxu0
    %v580 = vadd.f32 %v540, %v579
    %v581 = vpop.f32.mrb[0].mxu0
    %v582 = vpop.f32.mrb[0].mxu0
    %v583 = vpop.f32.mrb[0].mxu0
    %584 = vdwg.mxu0
    %585 = vmatprep.subr.bf16.mxu0 0
    %586 = vmatpush1.bf16.msra.mxu0 %v411
    %587 = vmatprep.subr.bf16.mxu0 0
    %588 = vmatpush1.bf16.msra.mxu0 0
    %589 = vmatprep.subr.bf16.mxu0 0
    %590 = vmatpush1.bf16.msra.mxu0 0
    %591 = vmatprep.subr.bf16.mxu0 0
    %592 = vmatpush1.bf16.msra.mxu0 0
    %593 = vmatprep.subr.bf16.mxu0 0
    %594 = vmatpush1.bf16.msra.mxu0 0
    %595 = vmatprep.subr.bf16.mxu0 0
    %596 = vmatpush1.bf16.msra.mxu0 0
    %597 = vmatprep.subr.bf16.mxu0 0
    %598 = vmatpush1.bf16.msra.mxu0 0
    %599 = vmatprep.subr.bf16.mxu0 0
    %600 = vmatpush1.bf16.msra.mxu0 0
    %601 = vmatprep.subr.bf16.mxu0 0
    %602 = vmatpush1.bf16.msra.mxu0 0
    %603 = vmatprep.subr.bf16.mxu0 0
    %604 = vmatpush1.bf16.msra.mxu0 0
    %605 = vmatprep.subr.bf16.mxu0 0
    %606 = vmatpush1.bf16.msra.mxu0 0
    %607 = vmatprep.subr.bf16.mxu0 0
    %608 = vmatpush1.bf16.msra.mxu0 0
    %609 = vmatprep.subr.bf16.mxu0 0
    %610 = vmatpush1.bf16.msra.mxu0 0
    %611 = vmatprep.subr.bf16.mxu0 0
    %612 = vmatpush1.bf16.msra.mxu0 0
    %613 = vmatprep.subr.bf16.mxu0 0
    %614 = vmatpush1.bf16.msra.mxu0 0
    %615 = vmatprep.subr.bf16.mxu0 0
    %616 = vmatpush1.bf16.msra.mxu0 0
    %617 = vmatprep.mubr.bf16.mxu0 0
    %618 = vmatmul.mubr.bf16.gmra.mrb[0].mxu0 %v463
    %v619 = vpop.f32.mrb[0].mxu0
    %v620 = vadd.f32 %v580, %v619
    %v621 = vpop.f32.mrb[0].mxu0
    %v622 = vpop.f32.mrb[0].mxu0
    %v623 = vpop.f32.mrb[0].mxu0
    %624 = vdwg.mxu0
    %v625 = vmax.f32 %v620, 0.0
    %v626 = vld [vmem:[%s7] sm:$0xff]
    %vm627 = vcmp.ge.u32.totalorder %v626, 858993459
    %v628 = vmul.f32 %v625, 1.25
    %v629 = vsel %vm627, %v628, 0.0
    %v630 = vpack.c.bf16 %v629, %v629
    %v631 = vld [vmem:[%s3] sm:$0xf]
    %v632 = vld [vmem:[%s3 + $0x4] sm:$0xf]
    %v633 = vld [vmem:[%s3 + $0x8] sm:$0xf]
    %v634 = vld [vmem:[%s3 + $0xc] sm:$0xf]
    %v635 = vld [vmem:[%s3 + $0x10] sm:$0xf]
    %v636 = vld [vmem:[%s3 + $0x14] sm:$0xf]
    %v637 = vld [vmem:[%s3 + $0x18] sm:$0xf]
    %v638 = vld [vmem:[%s3 + $0x1c] sm:$0xf]
    %v639 = vld [vmem:[%s3 + $0x20] sm:$0xf]
    %v640 = vld [vmem:[%s3 + $0x24] sm:$0xf]
    %v641 = vld [vmem:[%s3 + $0x28] sm:$0xf]
    %v642 = vld [vmem:[%s3 + $0x2c] sm:$0xf]
    %v643 = vld [vmem:[%s3 + $0x30] sm:$0x3]
    %v644 = vld [vmem:[%s4] sm:$0x1]
    %v646 = vlaneseq
    %v647 = vshrl.u32 %v646, 7
    %v648 = vsub.s32 0, %v647
    %v649 = vrot.slane %v644, %v648
    %v664 = vunpack.c.l.b16 %v631
    %v665 = vunpack.c.l.b16 %v632
    %v666 = vunpack.c.l.b16 %v633
    %v667 = vunpack.c.l.b16 %v634
    %v668 = vunpack.c.l.b16 %v635
    %v669 = vunpack.c.l.b16 %v636
    %v670 = vunpack.c.l.b16 %v637
    %v671 = vunpack.c.l.b16 %v638
    %v672 = vunpack.c.l.b16 %v639
    %v673 = vunpack.c.l.b16 %v640
    %v674 = vunpack.c.l.b16 %v641
    %v675 = vunpack.c.l.b16 %v642
    %v676 = vunpack.c.l.b16 %v643
    %v677 = vpack.c.b16 %v665, %v664
    %v678 = vpack.c.b16 %v667, %v666
    %v679 = vpack.c.b16 %v669, %v668
    %v680 = vpack.c.b16 %v671, %v670
    %v681 = vpack.c.b16 %v673, %v672
    %v682 = vpack.c.b16 %v675, %v674
    %v683 = vpack.c.b16 %v676, %v676
    %vm690 = vcmask 818176
    %v692 = vsel %vm690, %v630, 0
    %vm694 = vcmask 1041408
    %v696 = vsel %vm694, %v683, 0
    %698 = vmatprep.subr.bf16.mxu0 0
    %699 = vmatpush1.bf16.msra.mxu0 %v677
    %700 = vmatprep.subr.bf16.mxu0 0
    %701 = vmatpush1.bf16.msra.mxu0 %v678
    %702 = vmatprep.subr.bf16.mxu0 0
    %703 = vmatpush1.bf16.msra.mxu0 %v679
    %704 = vmatprep.subr.bf16.mxu0 0
    %705 = vmatpush1.bf16.msra.mxu0 %v680
    %706 = vmatprep.subr.bf16.mxu0 0
    %707 = vmatpush1.bf16.msra.mxu0 %v681
    %708 = vmatprep.subr.bf16.mxu0 0
    %709 = vmatpush1.bf16.msra.mxu0 %v682
    %710 = vmatprep.subr.bf16.mxu0 0
    %711 = vmatpush1.bf16.msra.mxu0 %v696
    %712 = vmatprep.subr.bf16.mxu0 0
    %713 = vmatpush1.bf16.msra.mxu0 0
    %714 = vmatprep.subr.bf16.mxu0 0
    %715 = vmatpush1.bf16.msra.mxu0 0
    %716 = vmatprep.subr.bf16.mxu0 0
    %717 = vmatpush1.bf16.msra.mxu0 0
    %718 = vmatprep.subr.bf16.mxu0 0
    %719 = vmatpush1.bf16.msra.mxu0 0
    %720 = vmatprep.subr.bf16.mxu0 0
    %721 = vmatpush1.bf16.msra.mxu0 0
    %722 = vmatprep.subr.bf16.mxu0 0
    %723 = vmatpush1.bf16.msra.mxu0 0
    %724 = vmatprep.subr.bf16.mxu0 0
    %725 = vmatpush1.bf16.msra.mxu0 0
    %726 = vmatprep.subr.bf16.mxu0 0
    %727 = vmatpush1.bf16.msra.mxu0 0
    %728 = vmatprep.subr.bf16.mxu0 0
    %729 = vmatpush1.bf16.msra.mxu0 0
    %730 = vmatprep.mubr.bf16.mxu0 0
    %731 = vmatmul.mubr.bf16.gmra.mrb[0].mxu0 %v692
    %v732 = vpop.f32.mrb[0].mxu0
    %v733 = vadd.f32 %v649, %v732
    %v734 = vpop.f32.mrb[0].mxu0
    %v735 = vpop.f32.mrb[0].mxu0
    %v736 = vpop.f32.mrb[0].mxu0
    %737 = vdwg.mxu0
    %v738 = vmax.f32 %v733, 0.0
    %v739 = vld [vmem:[%s8] sm:$0xff]
    %vm740 = vcmp.ge.u32.totalorder %v739, 2147483648
    %v741 = vmul.f32 %v738, 2.0
    %v742 = vsel %vm740, %v741, 0.0
    %v743 = vpack.c.bf16 %v742, %v742
    %v744 = vld [vmem:[%s5] sm:$0xf]
    %v745 = vld [vmem:[%s5 + $0x4] sm:$0xf]
    %v746 = vld [vmem:[%s5 + $0x8] sm:$0xf]
    %v747 = vld [vmem:[%s5 + $0xc] sm:$0xf]
    %v748 = vld [vmem:[%s5 + $0x10] sm:$0xf]
    %v749 = vld [vmem:[%s5 + $0x14] sm:$0xf]
    %v750 = vld [vmem:[%s5 + $0x18] sm:$0x1]
    %v751 = vld [vmem:[%s6] sm:$0x1]
    %v753 = vlaneseq
    %v754 = vshrl.u32 %v753, 7
    %v755 = vsub.s32 0, %v754
    %v756 = vrot.slane %v751, %v755
    %v765 = vunpack.c.l.b16 %v744
    %v766 = vunpack.c.l.b16 %v745
    %v767 = vunpack.c.l.b16 %v746
    %v768 = vunpack.c.l.b16 %v747
    %v769 = vunpack.c.l.b16 %v748
    %v770 = vunpack.c.l.b16 %v749
    %v771 = vunpack.c.l.b16 %v750
    %v772 = vpack.c.b16 %v766, %v765
    %v773 = vpack.c.b16 %v768, %v767
    %v774 = vpack.c.b16 %v770, %v769
    %v775 = vpack.c.b16 %v771, %v771
    %vm779 = vcmask 408576
    %v781 = vsel %vm779, %v743, 0
    %vm783 = vcmask 1040384
    %v785 = vsel %vm783, %v775, 0
    %787 = vmatprep.subr.bf16.mxu0 0
    %788 = vmatpush1.bf16.msra.mxu0 %v772
    %789 = vmatprep.subr.bf16.mxu0 0
    %790 = vmatpush1.bf16.msra.mxu0 %v773
    %791 = vmatprep.subr.bf16.mxu0 0
    %792 = vmatpush1.bf16.msra.mxu0 %v774
    %793 = vmatprep.subr.bf16.mxu0 0
    %794 = vmatpush1.bf16.msra.mxu0 %v785
    %795 = vmatprep.subr.bf16.mxu0 0
    %796 = vmatpush1.bf16.msra.mxu0 0
    %797 = vmatprep.subr.bf16.mxu0 0
    %798 = vmatpush1.bf16.msra.mxu0 0
    %799 = vmatprep.subr.bf16.mxu0 0
    %800 = vmatpush1.bf16.msra.mxu0 0
    %801 = vmatprep.subr.bf16.mxu0 0
    %802 = vmatpush1.bf16.msra.mxu0 0
    %803 = vmatprep.subr.bf16.mxu0 0
    %804 = vmatpush1.bf16.msra.mxu0 0
    %805 = vmatprep.subr.bf16.mxu0 0
    %806 = vmatpush1.bf16.msra.mxu0 0
    %807 = vmatprep.subr.bf16.mxu0 0
    %808 = vmatpush1.bf16.msra.mxu0 0
    %809 = vmatprep.subr.bf16.mxu0 0
    %810 = vmatpush1.bf16.msra.mxu0 0
    %811 = vmatprep.subr.bf16.mxu0 0
    %812 = vmatpush1.bf16.msra.mxu0 0
    %813 = vmatprep.subr.bf16.mxu0 0
    %814 = vmatpush1.bf16.msra.mxu0 0
    %815 = vmatprep.subr.bf16.mxu0 0
    %816 = vmatpush1.bf16.msra.mxu0 0
    %817 = vmatprep.subr.bf16.mxu0 0
    %818 = vmatpush1.bf16.msra.mxu0 0
    %819 = vmatprep.mubr.bf16.mxu0 0
    %820 = vmatmul.mubr.bf16.gmra.mrb[0].mxu0 %v781
    %v821 = vpop.f32.mrb[0].mxu0
    %v822 = vadd.f32 %v756, %v821
    %v823 = vpop.f32.mrb[0].mxu0
    %v824 = vpop.f32.mrb[0].mxu0
    %v825 = vpop.f32.mrb[0].mxu0
    %826 = vdwg.mxu0
    %v827 = vlaneseq
    %v828 = vand.u32 %v827, 127
    %vm829 = vcmp.lt.s32.totalorder %v828, 10
    %v830 = vsel %vm829, %v822, -1e+30
    %831 = vmax.xlane.f32.xlu0 %v830
    %v832 = vpop.xlane.xlu0 %831
    %v833 = vsub.f32 %v830, %v832
    %v834 = vmul.f32 %v833, 1.442695
    %v835 = vpow.pop %v834
    %836 = vadd.xlane.f32.xlu0 %v835
    %v837 = vpop.xlane.xlu0 %836
    %v838 = vlog2.pop %v837
    %v839 = vmul.f32 %v838, 0.6931472
    %v840 = vsub.f32 %v833, %v839
    %841 = vst [vmem:[#allocation2] sm:$0xff] %v840
    // Predicated region
    $region38: #{tpu_custom_call.1} parent=1 // pred_check
      _
    $region39: #{tpu_custom_call.1} parent=1 // pred_check_branch
      %843 = sbr.rel (0) target = $region41
    $region40: #{tpu_custom_call.1} parent=1 // pred_region
      %s845 = ssub.s32 128, 128
      %846 = vsyncadd [#allocation3], %s845
      %s848 = sshll.u32 [#allocation2], 4
      %s849 = int_to_ptr.vmem [resolvable:$true] %s848
      %851 = dma.vmem_to_hbm [thread:$0]  %s849, 128, %s9, [#allocation3]
    $region41: #{tpu_custom_call.1} parent=1 // pred_fallthru
      _
    // Predicated region
    $region42: #{tpu_custom_call.1} parent=1 // pred_check
      _
    $region43: #{tpu_custom_call.1} parent=1 // pred_check_branch
      %853 = sbr.rel (0) target = $region45
    $region44: #{tpu_custom_call.1} parent=1 // pred_region
      %854 = dma.done [#allocation3], 128
    $region45: #{tpu_custom_call.1} parent=1 // pred_fallthru
      _
    %855 = vsyncpa [#allocation3], 1

</llo_original>
